<compile_context>
chip_gen: v6e
topology: v6e:2x2x1
jax: 0.10.0
libtpu: 0.0.40
codegen_flags: <defaults>
</compile_context>

<pallas_src>
import jax
import jax.numpy as jnp
from jax.experimental import pallas as pl
from jax.experimental.pallas import tpu as pltpu


def _conv_bn_relu_kernel(wT_ref, xT_ref, bias_ref, o_ref):
    # wT_ref:   (Cout, K_pad)   conv weight with BN scale folded in (bf16 or f32)
    # xT_ref:   (K_pad, m_tile) im2col'ed input tile (lane-dense pixels)
    # bias_ref: (Cout, 1)       folded BN shift = beta - mean * scale   (f32)
    # o_ref:    (Cout, m_tile)  f32 output tile
    acc = jnp.dot(wT_ref[...], xT_ref[...], preferred_element_type=jnp.float32)
    o_ref[...] = jnp.maximum(acc + bias_ref[...], 0.0).astype(o_ref.dtype)


def _pick_m_tile(M, K_pad, Cout, bytes_per_el, vmem_budget=16 << 20):
    """Largest multiple-of-128 tile dividing M that fits a double-buffered VMEM budget.

    Prefers >= 2 grid steps when possible so the "parallel" M axis can be sharded
    across v7x's two TensorCores.  Falls back to a single full-M block for tiny /
    irregular M (full-extent blocks are always legal).
    """
    if M % 128 != 0:
        return M
    candidates = [t for t in range(128, M + 1, 128) if M % t == 0]
    fits = lambda t: 2 * (K_pad + Cout) * t * bytes_per_el <= vmem_budget
    fitting = [t for t in candidates if fits(t)] or [candidates[0]]
    half_or_less = [t for t in fitting if t <= M // 2]
    return max(half_or_less) if half_or_less else max(fitting)


def basic_conv2d(x_nchw, conv_w, gamma, beta, running_mean, running_var,
                 *, padding=1, eps=1e-3, operand_dtype=jnp.bfloat16, return_nchw=True):
    """Forward of BasicConv2d.  x_nchw: (N, Cin, H, W); conv_w: (Cout, Cin, KH, KW)."""
    N, Cin, H, W = x_nchw.shape
    Cout, _, KH, KW = conv_w.shape
    Ho = H + 2 * padding - KH + 1
    Wo = W + 2 * padding - KW + 1
    M = N * Ho * Wo
    K = KH * KW * Cin
    K_pad = ((K + 7) // 8) * 8          # sublane-aligned K

    # ---- BN folding (eval mode) ----
    scale = gamma.astype(jnp.float32) / jnp.sqrt(running_var.astype(jnp.float32) + eps)
    bias = (beta.astype(jnp.float32) - running_mean.astype(jnp.float32) * scale).reshape(Cout, 1)

    # ---- weight: (Cout, Cin, KH, KW) -> (Cout, K) with k = (kh*KW + kw)*Cin + cin,
    #      BN scale folded in, zero-padded to K_pad, cast to operand dtype ----
    wT = jnp.transpose(conv_w.astype(jnp.float32), (0, 2, 3, 1)).reshape(Cout, K)
    wT = jnp.pad(wT * scale[:, None], ((0, 0), (0, K_pad - K))).astype(operand_dtype)

    # ---- im2col directly in (K, M) layout (no NHWC flip, no (M,K)->(K,M) transpose) ----
    x_pad = jnp.pad(x_nchw.astype(operand_dtype),
                    ((0, 0), (0, 0), (padding, padding), (padding, padding)))
    x_cn = jnp.transpose(x_pad, (1, 0, 2, 3))                      # tiny (N<->Cin) swap only
    taps = [x_cn[:, :, kh:kh + Ho, kw:kw + Wo]                     # each: (Cin, N, Ho, Wo)
            for kh in range(KH) for kw in range(KW)]
    xT = jnp.stack(taps, axis=0).reshape(K, M)                     # k = (kh*KW+kw)*Cin + cin
    if K_pad != K:
        xT = jnp.pad(xT, ((0, K_pad - K), (0, 0)))                 # zero taps hit zero weights

    # ---- grid: tile the lane-dense M axis ("parallel" so v7x can use both TCs) ----
    bytes_per_el = jnp.dtype(operand_dtype).itemsize
    m_tile = _pick_m_tile(M, K_pad, Cout, bytes_per_el)
    grid = (M // m_tile,)

    cost = pl.CostEstimate(
        flops=2 * Cout * K_pad * M,
        transcendentals=0,
        bytes_accessed=(wT.size * bytes_per_el + xT.size * bytes_per_el
                        + bias.size * 4 + Cout * M * 4))

    o = pl.pallas_call(
        _conv_bn_relu_kernel,
        out_shape=jax.ShapeDtypeStruct((Cout, M), jnp.float32),
        grid_spec=pltpu.PrefetchScalarGridSpec(
            num_scalar_prefetch=0,
            grid=grid,
            in_specs=[
                pl.BlockSpec((Cout, K_pad), lambda i: (0, 0)),     # weight: resident
                pl.BlockSpec((K_pad, m_tile), lambda i: (0, i)),   # input tile
                pl.BlockSpec((Cout, 1), lambda i: (0, 0)),         # BN bias: resident
            ],
            out_specs=pl.BlockSpec((Cout, m_tile), lambda i: (0, i)),
        ),
        compiler_params=pltpu.CompilerParams(dimension_semantics=("parallel",)),
        cost_estimate=cost,
    )(wT, xT, bias)

    o_cm = o.reshape(Cout, N, Ho, Wo)                              # channel-major layout
    if not return_nchw:
        return o_cm                                                # for chaining fused layers
    return jnp.transpose(o_cm, (1, 0, 2, 3))                       # PyTorch NCHW at boundary


def _reference(x_nchw, conv_w, gamma, beta, running_mean, running_var,
               *, padding=1, eps=1e-3):
    y = jax.lax.conv_general_dilated(
        x_nchw.astype(jnp.float32), conv_w.astype(jnp.float32),
        window_strides=(1, 1), padding=[(padding, padding), (padding, padding)],
        dimension_numbers=("NCHW", "OIHW", "NCHW"))
    scale = gamma / jnp.sqrt(running_var + eps)
    shift = beta - running_mean * scale
    y = y * scale[None, :, None, None] + shift[None, :, None, None]
    return jnp.maximum(y, 0.0)


if __name__ == "__main__":
    # Module config: BasicConv2d(in_channels=4, out_channels=8, kernel_size=3, padding=1)
    N, Cin, H, W = 2, 4, 16, 16
    Cout, KH, KW = 8, 3, 3
    padding = 1

    key = jax.random.PRNGKey(0)
    kx, kw, kg, kb, km, kv = jax.random.split(key, 6)
    x = jax.random.normal(kx, (N, Cin, H, W), dtype=jnp.float32)
    conv_w = jax.random.normal(kw, (Cout, Cin, KH, KW), dtype=jnp.float32) * 0.1
    gamma = jax.random.uniform(kg, (Cout,), minval=0.5, maxval=1.5, dtype=jnp.float32)
    beta = jax.random.normal(kb, (Cout,), dtype=jnp.float32) * 0.1
    running_mean = jax.random.normal(km, (Cout,), dtype=jnp.float32) * 0.1
    running_var = jax.random.uniform(kv, (Cout,), minval=0.5, maxval=1.5, dtype=jnp.float32)

    ref = _reference(x, conv_w, gamma, beta, running_mean, running_var,
                     padding=padding, eps=1e-3)

    # f32-operand path: strict check against the reference.
    out_f32 = basic_conv2d(x, conv_w, gamma, beta, running_mean, running_var,
                           padding=padding, eps=1e-3, operand_dtype=jnp.float32)
    out_f32 = jax.block_until_ready(out_f32)
    assert out_f32.shape == (N, Cout, H, W)
    assert jnp.allclose(out_f32, ref, rtol=1e-3, atol=1e-3), "f32 path mismatch vs reference"

    # bf16-operand path (default; v6e/v7x MXU-friendly): f32 accumulator, looser tolerance
    # commensurate with bf16 operand rounding (~2^-8 relative per product, K=36 terms).
    out_bf16 = basic_conv2d(x, conv_w, gamma, beta, running_mean, running_var,
                            padding=padding, eps=1e-3)
    out_bf16 = jax.block_until_ready(out_bf16)
    assert out_bf16.shape == (N, Cout, H, W)
    assert jnp.allclose(out_bf16, ref, rtol=2e-2, atol=2e-2), "bf16 path mismatch vs reference"

    print("KERNEL_OK")
</pallas_src>

<mosaic_0001>
module attributes {stable_mosaic.version = 11 : i64} {
  func.func @_conv_bn_relu_kernel(%arg0: i32, %arg1: memref<8x40xf32, #tpu.memory_space<vmem>>, %arg2: memref<40x256xf32, #tpu.memory_space<vmem>>, %arg3: memref<8x1xf32, #tpu.memory_space<vmem>>, %arg4: memref<8x256xf32, #tpu.memory_space<vmem>>) attributes {dimension_semantics = [#tpu.dimension_semantics<parallel>], iteration_bounds = array<i64: 2>, scalar_prefetch = 0 : i64, scratch_operands = 0 : i64, tpu.core_type = #tpu.core_type<tc>, window_params = [{pipeline_mode = #tpu.pipeline_mode<synchronous>, transform_indices = @transform_0, window_bounds = array<i64: 8, 40>}, {transform_indices = @transform_1, window_bounds = array<i64: 40, 256>}, {pipeline_mode = #tpu.pipeline_mode<synchronous>, transform_indices = @transform_2, window_bounds = array<i64: 8, 1>}, {transform_indices = @transform_3, window_bounds = array<i64: 8, 256>}]} {
    %c0 = arith.constant 0 : index
    %c0_0 = arith.constant 0 : index
    %0 = vector.load %arg1[%c0, %c0_0] : memref<8x40xf32, #tpu.memory_space<vmem>>, vector<8x40xf32>
    %c0_1 = arith.constant 0 : index
    %c0_2 = arith.constant 0 : index
    %1 = vector.load %arg2[%c0_1, %c0_2] : memref<40x256xf32, #tpu.memory_space<vmem>>, vector<40x256xf32>
    %cst = arith.constant dense<0.000000e+00> : vector<8x256xf32>
    %2 = tpu.matmul %0, %1, %cst {dimension_numbers = #tpu.dot_dimension_numbers<[1], [0], [0], [1], [0, 0, 1, 1], [], []>} : vector<8x40xf32>, vector<40x256xf32>, vector<8x256xf32> -> vector<8x256xf32>
    %c0_3 = arith.constant 0 : index
    %c0_4 = arith.constant 0 : index
    %3 = vector.load %arg3[%c0_3, %c0_4] : memref<8x1xf32, #tpu.memory_space<vmem>>, vector<8x1xf32>
    %4 = vector.broadcast %3 : vector<8x1xf32> to vector<8x256xf32>
    %5 = arith.addf %2, %4 : vector<8x256xf32>
    %cst_5 = arith.constant 0.000000e+00 : f32
    %6 = vector.broadcast %cst_5 : f32 to vector<8x256xf32>
    %7 = arith.maximumf %5, %6 : vector<8x256xf32>
    %c0_6 = arith.constant 0 : index
    %c0_7 = arith.constant 0 : index
    %8 = vector.load %arg4[%c0_6, %c0_7] : memref<8x256xf32, #tpu.memory_space<vmem>>, vector<8x256xf32>
    tpu.vector_store %arg4[%c0_6, %c0_7], %7 {strides = array<i32>} : memref<8x256xf32, #tpu.memory_space<vmem>>, vector<8x256xf32>,
    return
  }
  func.func @transform_0(%arg0: i32) -> (i32, i32) {
    %c0_i32 = arith.constant 0 : i32
    %c0_i32_0 = arith.constant 0 : i32
    %c0_i32_1 = arith.constant 0 : i32
    return %c0_i32, %c0_i32_0 : i32, i32
  }
  func.func @transform_1(%arg0: i32) -> (i32, i32) {
    %c0_i32 = arith.constant 0 : i32
    %c0_i32_0 = arith.constant 0 : i32
    return %c0_i32, %arg0 : i32, i32
  }
  func.func @transform_2(%arg0: i32) -> (i32, i32) {
    %c0_i32 = arith.constant 0 : i32
    %c0_i32_0 = arith.constant 0 : i32
    %c0_i32_1 = arith.constant 0 : i32
    return %c0_i32, %c0_i32_0 : i32, i32
  }
  func.func @transform_3(%arg0: i32) -> (i32, i32) {
    %c0_i32 = arith.constant 0 : i32
    %c0_i32_0 = arith.constant 0 : i32
    return %c0_i32, %arg0 : i32, i32
  }
}

</mosaic_0001>

<llo_original>
// kernel: tpu_custom_call.1
$region0: #{tpu_custom_call.1}
  #allocation0 [shape = 'u32[]', space=smem, size = 0x4, offset = 0x4, fixed_abs, tag = 'smem constant byte address 0x4 - core index']
  #allocation1 [shape = 'u32[144,128]{1,0:T(1,128)}', space=vmem, size = 0x12000, scoped, tag = 'internal scratch']
  %s0 = inlined_call_operand.vmem [shape: f32[8,40], index: 0, kind: input, shape index: {}]
  %s1 = inlined_call_operand.hbm [shape: f32[40,512], index: 1, kind: input, shape index: {}]
  %s2 = inlined_call_operand.vmem [shape: f32[8,1], index: 2, kind: input, shape index: {}]
  %s3 = inlined_call_operand.hbm [shape: f32[8,512], index: 3, kind: output, shape index: {}]
  %s4 = sld [smem:[#allocation0]]
  $region49: #{tpu_custom_call.1} parent=0
    _
  %s6 = ssub.s32 1, %s4
  %s7 = scalar_select 0, %s6, %s4
  $region1: #{tpu_custom_call.1} parent=0
    #allocation2 [shape = 'u8[81920]{0}', space=vmem, size = 0x14000, scoped, tag = 'input window, operand 1']
    #allocation3 [shape = 's32[2]{0}', space=sflag, size = 0x8, scoped, tag = 'scoped memory for tpu_custom_call.1']
    #allocation4 [shape = 's32[2]{0}', space=sflag, size = 0x8, scoped, tag = 'scoped memory for tpu_custom_call.1']
    #allocation5 [shape = 'u8[16384]{0}', space=vmem, size = 0x4000, scoped, tag = 'output window, operand 0']
    %8 = vsyncpa [#allocation3], 0
    %s9 = scalar_lea.sflag [#allocation3], 1
    %10 = vsyncpa %s9, 0
    %11 = vsyncpa [#allocation4], 0
    %s12 = scalar_lea.sflag [#allocation4], 1
    %13 = vsyncpa %s12, 0
    loop: start=0, step=1, limit=4
    $region2: #{tpu_custom_call.1} parent=1 // loop_pre_header
      _
    $region3: #{tpu_custom_call.1} parent=1 // loop_header
      %s15 = sphi 0, %s19
      %p16 = scmp.ge.s32.totalorder %s15, 4
      %s23 = sphi 0, %s23
      %s25 = sphi 0, %s23
      %s26 = sphi 0, %s25
      %s40 = sphi 0, %s26
      %s46 = sphi 0, %s48
      %s49 = sphi 0, %s46
      %s50 = sphi 0, %s49
      %s66 = sphi 0, %s50
      %s70 = sphi 0, %s70
      %s72 = sphi 0, %s70
      %s73 = sphi 0, %s72
      %s87 = sphi 0, %s73
      %s93 = sphi 0, %s95
      %s96 = sphi 0, %s93
      %s97 = sphi 0, %s96
      %s113 = sphi 0, %s97
    $region4: #{tpu_custom_call.1} parent=1 // loop_header_branch
      %18 = sbr.rel (%p16) target = $region8
    $region5: #{tpu_custom_call.1} parent=1 // loop_body
      %s20 = ssub.s32 %s15, 1
      %s21 = ssub.s32 %s15, 2
      %s22 = sadd.s32 %s15, 1
      %s24 = sadd.s32 %s23, 1
      %p27 = scmp.eq.s32.totalorder %s15, 1
      %p28 = scmp.ne.s32.totalorder %s23, %s25
      %p29 = scmp.eq.s32.totalorder %s15, 0
      %p30 = por %p28, %p29
      %p31 = scmp.ne.s32.totalorder %s23, %s25
      %p32 = scmp.eq.s32.totalorder %s20, 1
      %p33 = por %p31, %p32
      %p34 = scmp.ne.s32.totalorder %s25, %s26
      %p35 = scmp.eq.s32.totalorder %s20, 0
      %p36 = por %p34, %p35
      %p37 = scmp.ne.s32.totalorder %s25, %s26
      %p38 = scmp.eq.s32.totalorder %s21, 1
      %p39 = por %p37, %p38
      %p41 = scmp.ne.s32.totalorder %s26, %s40
      %p42 = scmp.eq.s32.totalorder %s21, 0
      %p43 = por %p41, %p42
      %s44 = ssub.s32 %s15, %s22
      %p45 = scmp.eq.s32.totalorder %s44, 0
      %s47 = sadd.s32 %s46, 1
      %s48 = scalar_select %p45, %s46, %s47
      %p51 = pneg %p45
      %p52 = scmp.eq.s32.totalorder %s15, 1
      %p53 = por %p51, %p52
      %p54 = scmp.ne.s32.totalorder %s46, %s49
      %p55 = scmp.eq.s32.totalorder %s15, 0
      %p56 = por %p54, %p55
      %p57 = scmp.ne.s32.totalorder %s46, %s49
      %p58 = scmp.eq.s32.totalorder %s20, 1
      %p59 = por %p57, %p58
      %p60 = scmp.ne.s32.totalorder %s49, %s50
      %p61 = scmp.eq.s32.totalorder %s20, 0
      %p62 = por %p60, %p61
      %p63 = scmp.ne.s32.totalorder %s49, %s50
      %p64 = scmp.eq.s32.totalorder %s21, 1
      %p65 = por %p63, %p64
      %p67 = scmp.ne.s32.totalorder %s50, %s66
      %p68 = scmp.eq.s32.totalorder %s21, 0
      %p69 = por %p67, %p68
      %s71 = sadd.s32 %s70, 1
      %p74 = scmp.eq.s32.totalorder %s15, 1
      %p75 = scmp.ne.s32.totalorder %s70, %s72
      %p76 = scmp.eq.s32.totalorder %s15, 0
      %p77 = por %p75, %p76
      %p78 = scmp.ne.s32.totalorder %s70, %s72
      %p79 = scmp.eq.s32.totalorder %s20, 1
      %p80 = por %p78, %p79
      %p81 = scmp.ne.s32.totalorder %s72, %s73
      %p82 = scmp.eq.s32.totalorder %s20, 0
      %p83 = por %p81, %p82
      %p84 = scmp.ne.s32.totalorder %s72, %s73
      %p85 = scmp.eq.s32.totalorder %s21, 1
      %p86 = por %p84, %p85
      %p88 = scmp.ne.s32.totalorder %s73, %s87
      %p89 = scmp.eq.s32.totalorder %s21, 0
      %p90 = por %p88, %p89
      %s91 = ssub.s32 %s15, %s22
      %p92 = scmp.eq.s32.totalorder %s91, 0
      %s94 = sadd.s32 %s93, 1
      %s95 = scalar_select %p92, %s93, %s94
      %p98 = pneg %p92
      %p99 = scmp.eq.s32.totalorder %s15, 1
      %p100 = por %p98, %p99
      %p101 = scmp.ne.s32.totalorder %s93, %s96
      %p102 = scmp.eq.s32.totalorder %s15, 0
      %p103 = por %p101, %p102
      %p104 = scmp.ne.s32.totalorder %s93, %s96
      %p105 = scmp.eq.s32.totalorder %s20, 1
      %p106 = por %p104, %p105
      %p107 = scmp.ne.s32.totalorder %s96, %s97
      %p108 = scmp.eq.s32.totalorder %s20, 0
      %p109 = por %p107, %p108
      %p110 = scmp.ne.s32.totalorder %s96, %s97
      %p111 = scmp.eq.s32.totalorder %s21, 1
      %p112 = por %p110, %p111
      %p114 = scmp.ne.s32.totalorder %s97, %s113
      %p115 = scmp.eq.s32.totalorder %s21, 0
      %p116 = por %p114, %p115
      %p117 = scmp.le.s32.totalorder 1, %s15
      %p118 = scmp.lt.s32.totalorder %s15, 3
      %p119 = pnand %p117, %p118
      %p120 = pneg %p119
      // Predicated region
      $region9: #{tpu_custom_call.1} parent=5 // pred_check
        _
      $region10: #{tpu_custom_call.1} parent=5 // pred_check_branch
        %122 = sbr.rel (%p119) target = $region12
      $region11: #{tpu_custom_call.1} parent=5 // pred_region
        %s123 = ssub.s32 %s15, 1
        // Predicated region
        $region13: #{tpu_custom_call.1} parent=11 // pred_check
          %p124 = pneg %p36
        $region14: #{tpu_custom_call.1} parent=11 // pred_check_branch
          %126 = sbr.rel (%p124) target = $region16
        $region15: #{tpu_custom_call.1} parent=11 // pred_region
          _
        $region16: #{tpu_custom_call.1} parent=11 // pred_fallthru
          _
        // Predicated region
        $region17: #{tpu_custom_call.1} parent=11 // pred_check
          %p127 = pneg %p83
        $region18: #{tpu_custom_call.1} parent=11 // pred_check_branch
          %129 = sbr.rel (%p127) target = $region20
        $region19: #{tpu_custom_call.1} parent=11 // pred_region
          _
        $region20: #{tpu_custom_call.1} parent=11 // pred_fallthru
          _
      $region12: #{tpu_custom_call.1} parent=5 // pred_fallthru
        _
      %p130 = scmp.lt.s32.totalorder %s15, 2
      // Predicated region
      $region21: #{tpu_custom_call.1} parent=5 // pred_check
        %p131 = pneg %p130
      $region22: #{tpu_custom_call.1} parent=5 // pred_check_branch
        %133 = sbr.rel (%p131) target = $region24
      $region23: #{tpu_custom_call.1} parent=5 // pred_region
        // Predicated region
        $region25: #{tpu_custom_call.1} parent=23 // pred_check
          %p134 = pneg %p56
        $region26: #{tpu_custom_call.1} parent=23 // pred_check_branch
          %136 = sbr.rel (%p134) target = $region28
        $region27: #{tpu_custom_call.1} parent=23 // pred_region
          %s137 = sand.u32 %s46, 1
          %s138 = scalar_lea.sflag [#allocation3], %s137
          %s139 = sand.u32 %s46, 1
          %s140 = smul.addr %s139, 80
          %s141 = scalar_lea.vmem [#allocation2], %s140
          %s142 = smul.u32 2, %s15
          %s144 = ssub.s32 1280, 1280
          %145 = vsyncadd %s138, %s144
          %s146 = smul.addr %s142, 128
          %s147 = scalar_lea.hbm %s1, %s146
          %s148 = sshll.u32 %s141, 4
          %s149 = int_to_ptr.vmem [resolvable:$true] %s148
          %154 = dma.hbm_to_vmem [thread:$0]  %s147, 1280, %s149, %s138, 512, 256, 16
        $region28: #{tpu_custom_call.1} parent=23 // pred_fallthru
          _
      $region24: #{tpu_custom_call.1} parent=5 // pred_fallthru
        _
      %p155 = scmp.le.s32.totalorder 1, %s15
      %p156 = scmp.lt.s32.totalorder %s15, 3
      %p157 = pnand %p155, %p156
      %p158 = pneg %p157
      // Predicated region
      $region29: #{tpu_custom_call.1} parent=5 // pred_check
        _
      $region30: #{tpu_custom_call.1} parent=5 // pred_check_branch
        %160 = sbr.rel (%p157) target = $region32
      $region31: #{tpu_custom_call.1} parent=5 // pred_region
        %s161 = ssub.s32 %s15, 1
        %s162 = sand.u32 %s49, 1
        %s163 = scalar_lea.sflag [#allocation3], %s162
        %s164 = sand.u32 %s49, 1
        %s165 = smul.addr %s164, 80
        %s166 = scalar_lea.vmem [#allocation2], %s165
        // Predicated region
        $region33: #{tpu_custom_call.1} parent=31 // pred_check
          %p167 = pneg %p62
        $region34: #{tpu_custom_call.1} parent=31 // pred_check_branch
          %169 = sbr.rel (%p167) target = $region36
        $region35: #{tpu_custom_call.1} parent=31 // pred_region
          %170 = dma.done %s163, 1280
        $region36: #{tpu_custom_call.1} parent=31 // pred_fallthru
          _
        %p171 = pneg %p36
        %p172 = pneg %p33
        %s173 = sand.u32 %s49, 1
        %s174 = scalar_lea.sflag [#allocation3], %s173
        %s175 = sand.u32 %s49, 1
        %s176 = smul.addr %s175, 80
        %s177 = scalar_lea.vmem [#allocation2], %s176
        %p178 = pneg %p62
        %p179 = pneg %p59
        %p180 = pneg %p83
        %p181 = pneg %p80
        %p182 = pneg %p109
        %p183 = pneg %p106
        %s184 = sand.u32 %s96, 1
        %s185 = scalar_lea.sflag [#allocation4], %s184
        %s186 = sand.u32 %s96, 1
        %s187 = smul.addr %s186, 16
        %s188 = scalar_lea.vmem [#allocation5], %s187
        %s189 = smul.u32 2, %s20
        %s190 = smul.u32 2, %s20
        %v191 = vld [vmem:[%s0] sm:$0xff]
        %v192 = vld [vmem:[%s166] sm:$0xff]
        %v193 = vld [vmem:[%s166 + $0x8] sm:$0xff]
        %v194 = vld [vmem:[%s166 + $0x10] sm:$0xff]
        %v195 = vld [vmem:[%s166 + $0x18] sm:$0xff]
        %v196 = vld [vmem:[%s166 + $0x20] sm:$0xff]
        %v197 = vld [vmem:[%s166 + $0x28] sm:$0xff]
        %v198 = vld [vmem:[%s166 + $0x30] sm:$0xff]
        %v199 = vld [vmem:[%s166 + $0x38] sm:$0xff]
        %v200 = vld [vmem:[%s166 + $0x40] sm:$0xff]
        %v201 = vld [vmem:[%s166 + $0x48] sm:$0xff]
        %v202 = vld [vmem:[%s2] sm:$0xff]
        %204 = vset.pattern.permute.xlu0 0
        %205 = vperm.xlu0 %204, %v202
        %v206 = vpop.permute.xlu0 %205
        %vm208 = vcmask 326656
        %v210 = vsel %vm208, %v191, 0
        %212 = vmatprep.subr.mxu0 0.0
        %213 = vmatpush1.msra.mxu0 0.0
        %214 = vmatprep.subr.mxu0 0.0
        %215 = vmatpush1.msra.mxu0 0.0
        %216 = vmatprep.subr.mxu0 0.0
        %217 = vmatpush1.msra.mxu0 0.0
        %218 = vmatprep.subr.mxu0 0.0
        %219 = vmatpush1.msra.mxu0 0.0
        %220 = vmatprep.subr.mxu0 0.0
        %221 = vmatpush1.msra.mxu0 0.0
        %222 = vmatprep.subr.mxu0 0.0
        %223 = vmatpush1.msra.mxu0 0.0
        %224 = vmatprep.subr.mxu0 0.0
        %225 = vmatpush1.msra.mxu0 0.0
        %226 = vmatprep.subr.mxu0 0.0
        %227 = vmatpush1.msra.mxu0 0.0
        %228 = vmatprep.subr.mxu0 0.0
        %229 = vmatpush1.msra.mxu0 0.0
        %230 = vmatprep.subr.mxu0 0.0
        %231 = vmatpush1.msra.mxu0 0.0
        %232 = vmatprep.subr.mxu0 0.0
        %233 = vmatpush1.msra.mxu0 0.0
        %234 = vmatprep.subr.mxu0 %v201
        %235 = vmatpush1.msra.mxu0 %v200
        %236 = vmatprep.subr.mxu0 %v199
        %237 = vmatpush1.msra.mxu0 %v198
        %238 = vmatprep.subr.mxu0 %v197
        %239 = vmatpush1.msra.mxu0 %v196
        %240 = vmatprep.subr.mxu0 %v195
        %241 = vmatpush1.msra.mxu0 %v194
        %242 = vmatprep.subr.mxu0 %v193
        %243 = vmatpush1.msra.mxu0 %v192
        %244 = vmatprep.subr.mxu0 0.0
        %245 = vmatpush2.msra.mxu0 0.0
        %246 = vmatprep.subr.mxu0 0.0
        %247 = vmatpush2.msra.mxu0 0.0
        %248 = vmatprep.subr.mxu0 0.0
        %249 = vmatpush2.msra.mxu0 0.0
        %250 = vmatprep.subr.mxu0 0.0
        %251 = vmatpush2.msra.mxu0 0.0
        %252 = vmatprep.subr.mxu0 0.0
        %253 = vmatpush2.msra.mxu0 0.0
        %254 = vmatprep.subr.mxu0 0.0
        %255 = vmatpush2.msra.mxu0 0.0
        %256 = vmatprep.subr.mxu0 0.0
        %257 = vmatpush2.msra.mxu0 0.0
        %258 = vmatprep.subr.mxu0 0.0
        %259 = vmatpush2.msra.mxu0 0.0
        %260 = vmatprep.subr.mxu0 0.0
        %261 = vmatpush2.msra.mxu0 0.0
        %262 = vmatprep.subr.mxu0 0.0
        %263 = vmatpush2.msra.mxu0 0.0
        %264 = vmatprep.subr.mxu0 0.0
        %265 = vmatpush2.msra.mxu0 0.0
        %266 = vmatprep.subr.mxu0 0.0
        %267 = vmatpush2.msra.mxu0 0.0
        %268 = vmatprep.subr.mxu0 0.0
        %269 = vmatpush2.msra.mxu0 0.0
        %270 = vmatprep.subr.mxu0 0.0
        %271 = vmatpush2.msra.mxu0 0.0
        %272 = vmatprep.subr.mxu0 0.0
        %273 = vmatpush2.msra.mxu0 0.0
        %274 = vmatprep.subr.mxu0 0.0
        %275 = vmatpush2.msra.mxu0 0.0
        %276 = vmatprep.mubr.f32.mxu0 0.0
        %277 = vmatmul.mubr.f32.gmra.mxu0 %v210
        %v278 = vpop.f32.mrf.mxu0
        %v279 = vadd.f32 %v206, %v278
        %v280 = vpop.f32.mrf.mxu0
        %v281 = vadd.f32 %v206, %v280
        %282 = vdwg.mxu0
        %v283 = vmax.f32 %v279, 0.0
        %v284 = vmax.f32 %v281, 0.0
        %285 = vst [vmem:[%s188] sm:$0xff] %v283
        %286 = vst [vmem:[%s188 + $0x8] sm:$0xff] %v284
        %s287 = sand.u32 %s96, 1
        %s288 = scalar_lea.sflag [#allocation4], %s287
        %s289 = sand.u32 %s96, 1
        %s290 = smul.addr %s289, 16
        %s291 = scalar_lea.vmem [#allocation5], %s290
        // Predicated region
        $region37: #{tpu_custom_call.1} parent=31 // pred_check
          %p292 = pneg %p106
        $region38: #{tpu_custom_call.1} parent=31 // pred_check_branch
          %294 = sbr.rel (%p292) target = $region40
        $region39: #{tpu_custom_call.1} parent=31 // pred_region
          %s295 = smul.u32 2, %s20
          %s297 = ssub.s32 256, 256
          %298 = vsyncadd %s288, %s297
          %s299 = smul.addr %s295, 128
          %s300 = scalar_lea.hbm %s3, %s299
          %s302 = sshll.u32 %s291, 4
          %s303 = int_to_ptr.vmem [resolvable:$true] %s302
          %305 = dma.vmem_to_hbm [thread:$0]  %s303, 256, %s300, %s288
        $region40: #{tpu_custom_call.1} parent=31 // pred_fallthru
          _
      $region32: #{tpu_custom_call.1} parent=5 // pred_fallthru
        _
      %p306 = scmp.le.s32.totalorder 2, %s15
      // Predicated region
      $region41: #{tpu_custom_call.1} parent=5 // pred_check
        %p307 = pneg %p306
      $region42: #{tpu_custom_call.1} parent=5 // pred_check_branch
        %309 = sbr.rel (%p307) target = $region44
      $region43: #{tpu_custom_call.1} parent=5 // pred_region
        %s310 = ssub.s32 %s15, 2
        // Predicated region
        $region45: #{tpu_custom_call.1} parent=43 // pred_check
          %p311 = pneg %p112
        $region46: #{tpu_custom_call.1} parent=43 // pred_check_branch
          %313 = sbr.rel (%p311) target = $region48
        $region47: #{tpu_custom_call.1} parent=43 // pred_region
          %s314 = sand.u32 %s97, 1
          %s315 = scalar_lea.sflag [#allocation4], %s314
          %s316 = sand.u32 %s97, 1
          %s317 = smul.addr %s316, 16
          %s318 = scalar_lea.vmem [#allocation5], %s317
          %319 = dma.done %s315, 256
        $region48: #{tpu_custom_call.1} parent=43 // pred_fallthru
          _
      $region44: #{tpu_custom_call.1} parent=5 // pred_fallthru
        _
    $region6: #{tpu_custom_call.1} parent=1 // loop_footer
      %s19 = sadd.s32 1, %s15
    $region7: #{tpu_custom_call.1} parent=1 // loop_footer_branch
      %14 = sbr.rel target = $region3
    $region8: #{tpu_custom_call.1} parent=1 // loop_exit
      _
    %320 = vsyncpa [#allocation3], 1
    %s321 = scalar_lea.sflag [#allocation3], 1
    %322 = vsyncpa %s321, 1
    %323 = vsyncpa [#allocation4], 1
    %s324 = scalar_lea.sflag [#allocation4], 1
    %325 = vsyncpa %s324, 1

</llo_original>
